<compile_context>
chip_gen: v6e
topology: v6e:2x2x1
jax: 0.10.0
libtpu: 0.0.40
codegen_flags: <defaults>
</compile_context>

<pallas_src>
import functools

import jax
import jax.numpy as jnp
from jax.experimental import pallas as pl
from jax.experimental.pallas import tpu as pltpu

HIDDEN = 512
BN_EPS = 1e-5


def _round_up(x, m):
    return ((x + m - 1) // m) * m


def _pass1_kernel(x_ref, w1_ref, b1_ref, h_ref, sum_ref, sq_ref, *, tb, b_real):
    """Linear1 (bf16 MXU, f32 acc) + cross-tile sum / sumsq accumulation."""
    i = pl.program_id(0)

    @pl.when(i == 0)
    def _():
        sum_ref[...] = jnp.zeros_like(sum_ref)
        sq_ref[...] = jnp.zeros_like(sq_ref)

    h = jnp.dot(x_ref[...], w1_ref[...], preferred_element_type=jnp.float32)
    h = h + b1_ref[...]                       # f32 epilogue
    h_ref[...] = h.astype(h_ref.dtype)        # stash hidden activations (bf16)

    # Mask padded batch rows out of the batch statistics.
    row = jax.lax.broadcasted_iota(jnp.int32, h.shape, 0) + i * tb
    hm = jnp.where(row < b_real, h, 0.0)
    sum_ref[...] += jnp.sum(hm, axis=0, keepdims=True)
    sq_ref[...] += jnp.sum(hm * hm, axis=0, keepdims=True)


def _pass2_kernel(h_ref, mean_ref, rstd_ref, gamma_ref, beta_ref, w2_ref, b2_ref, o_ref):
    """BatchNorm apply + ReLU (f32) + Linear2 (bf16 MXU, f32 acc)."""
    h = h_ref[...].astype(jnp.float32)
    hn = (h - mean_ref[...]) * rstd_ref[...] * gamma_ref[...] + beta_ref[...]
    ha = jnp.maximum(hn, 0.0)
    out = jnp.dot(ha.astype(jnp.bfloat16), w2_ref[...],
                  preferred_element_type=jnp.float32)
    o_ref[...] = (out + b2_ref[...]).astype(o_ref.dtype)


def mlp_forward(x, w1, b1, gamma, beta, w2, b2, *, block_b=512):
    B, in_features = x.shape
    out_features = w2.shape[1]

    # Batch tile: multiple of 16 (bf16 sublane packing); sized for VMEM headroom
    # on v7x (64 MiB) while still amortizing per-step overhead on v5e/v6e.
    tb = min(block_b, _round_up(B, 16))
    b_pad = _round_up(B, tb)
    num_tiles = b_pad // tb

    # Lane-dense output: pad out_features to a multiple of 128.
    n_pad = _round_up(out_features, 128)

    # Wrapper-side casts / zero-padding (done once; halves W/x DMA bytes).
    x_bf = x.astype(jnp.bfloat16)
    if b_pad != B:
        x_bf = jnp.pad(x_bf, ((0, b_pad - B), (0, 0)))
    w1_bf = w1.astype(jnp.bfloat16)
    w2_bf = w2.astype(jnp.bfloat16)
    b2_p = b2
    if n_pad != out_features:
        w2_bf = jnp.pad(w2_bf, ((0, 0), (0, n_pad - out_features)))
        b2_p = jnp.pad(b2, ((0, 0), (0, n_pad - out_features)))

    cparams_reduce = pltpu.CompilerParams(
        dimension_semantics=("arbitrary",),   # stats accumulate across batch tiles
        vmem_limit_bytes=48 << 20,            # leave headroom on v7x's 64 MiB VMEM
    )
    cparams_parallel = pltpu.CompilerParams(
        dimension_semantics=("parallel",),    # shard batch tiles across TCs (v7x)
        vmem_limit_bytes=48 << 20,
    )

    # ---------------- pass 1: Linear1 + batch sum / sumsq ----------------
    h_bf, s, sq = pl.pallas_call(
        functools.partial(_pass1_kernel, tb=tb, b_real=B),
        out_shape=(
            jax.ShapeDtypeStruct((b_pad, HIDDEN), jnp.bfloat16),
            jax.ShapeDtypeStruct((1, HIDDEN), jnp.float32),
            jax.ShapeDtypeStruct((1, HIDDEN), jnp.float32),
        ),
        grid=(num_tiles,),
        in_specs=[
            pl.BlockSpec((tb, in_features), lambda i: (i, 0)),
            pl.BlockSpec((in_features, HIDDEN), lambda i: (0, 0)),  # resident
            pl.BlockSpec((1, HIDDEN), lambda i: (0, 0)),            # resident
        ],
        out_specs=(
            pl.BlockSpec((tb, HIDDEN), lambda i: (i, 0)),
            pl.BlockSpec((1, HIDDEN), lambda i: (0, 0)),            # accumulator
            pl.BlockSpec((1, HIDDEN), lambda i: (0, 0)),            # accumulator
        ),
        compiler_params=cparams_reduce,
    )(x_bf, w1_bf, b1)

    # Tiny XLA epilogue: full-batch biased statistics (BatchNorm1d training fwd).
    mean = s / B
    var = jnp.maximum(sq / B - mean * mean, 0.0)
    rstd = jax.lax.rsqrt(var + BN_EPS)

    # ---------------- pass 2: BN apply + ReLU + Linear2 ----------------
    out_pad = pl.pallas_call(
        _pass2_kernel,
        out_shape=jax.ShapeDtypeStruct((b_pad, n_pad), jnp.float32),
        grid=(num_tiles,),
        in_specs=[
            pl.BlockSpec((tb, HIDDEN), lambda i: (i, 0)),
            pl.BlockSpec((1, HIDDEN), lambda i: (0, 0)),
            pl.BlockSpec((1, HIDDEN), lambda i: (0, 0)),
            pl.BlockSpec((1, HIDDEN), lambda i: (0, 0)),
            pl.BlockSpec((1, HIDDEN), lambda i: (0, 0)),
            pl.BlockSpec((HIDDEN, n_pad), lambda i: (0, 0)),        # resident
            pl.BlockSpec((1, n_pad), lambda i: (0, 0)),             # resident
        ],
        out_specs=pl.BlockSpec((tb, n_pad), lambda i: (i, 0)),
        compiler_params=cparams_parallel,
    )(h_bf, mean, rstd, gamma, beta, w2_bf, b2_p)

    return out_pad[:B, :out_features]


def init_params(key, in_features, out_features):
    k1, k2, k3, k4 = jax.random.split(key, 4)
    # Mimic PyTorch Linear default init (uniform +/- 1/sqrt(fan_in)).
    bound1 = 1.0 / (in_features ** 0.5)
    w1 = jax.random.uniform(k1, (in_features, HIDDEN), jnp.float32, -bound1, bound1)
    b1 = jax.random.uniform(k2, (1, HIDDEN), jnp.float32, -bound1, bound1)
    bound2 = 1.0 / (HIDDEN ** 0.5)
    w2 = jax.random.uniform(k3, (HIDDEN, out_features), jnp.float32, -bound2, bound2)
    b2 = jax.random.uniform(k4, (1, out_features), jnp.float32, -bound2, bound2)
    # BatchNorm1d affine params: weight=1, bias=0 (PyTorch defaults).
    gamma = jnp.ones((1, HIDDEN), jnp.float32)
    beta = jnp.zeros((1, HIDDEN), jnp.float32)
    return w1, b1, gamma, beta, w2, b2


def _reference(x, w1, b1, gamma, beta, w2, b2):
    h = x @ w1 + b1
    mean = jnp.mean(h, axis=0, keepdims=True)
    var = jnp.mean((h - mean) ** 2, axis=0, keepdims=True)
    hn = (h - mean) * jax.lax.rsqrt(var + BN_EPS) * gamma + beta
    return jnp.maximum(hn, 0.0) @ w2 + b2


if __name__ == "__main__":
    B, in_features, out_features = 8, 32, 16
    key = jax.random.PRNGKey(0)
    kx, kp = jax.random.split(key)
    x = jax.random.normal(kx, (B, in_features), jnp.float32)
    params = init_params(kp, in_features, out_features)

    out = mlp_forward(x, *params)
    jax.block_until_ready(out)
    assert out.shape == (B, out_features)

    ref = _reference(x, *params)
    # bf16 MXU operands -> loose tolerance vs f32 reference.
    assert jnp.max(jnp.abs(out - ref)) < 1e-1, float(jnp.max(jnp.abs(out - ref)))
    print("KERNEL_OK")
</pallas_src>

<mosaic_0001>
module attributes {stable_mosaic.version = 11 : i64} {
  func.func @_pass1_kernel(%arg0: i32, %arg1: memref<16x32xbf16, #tpu.memory_space<vmem>>, %arg2: memref<32x512xbf16, #tpu.memory_space<vmem>>, %arg3: memref<1x512xf32, #tpu.memory_space<vmem>>, %arg4: memref<16x512xbf16, #tpu.memory_space<vmem>>, %arg5: memref<1x512xf32, #tpu.memory_space<vmem>>, %arg6: memref<1x512xf32, #tpu.memory_space<vmem>>) attributes {dimension_semantics = [#tpu.dimension_semantics<arbitrary>], iteration_bounds = array<i64: 1>, scalar_prefetch = 0 : i64, scratch_operands = 0 : i64, tpu.core_type = #tpu.core_type<tc>, window_params = [{transform_indices = @transform_0, window_bounds = array<i64: 16, 32>}, {pipeline_mode = #tpu.pipeline_mode<synchronous>, transform_indices = @transform_1, window_bounds = array<i64: 32, 512>}, {pipeline_mode = #tpu.pipeline_mode<synchronous>, transform_indices = @transform_2, window_bounds = array<i64: 1, 512>}, {transform_indices = @transform_3, window_bounds = array<i64: 16, 512>}, {pipeline_mode = #tpu.pipeline_mode<synchronous>, transform_indices = @transform_4, window_bounds = array<i64: 1, 512>}, {pipeline_mode = #tpu.pipeline_mode<synchronous>, transform_indices = @transform_5, window_bounds = array<i64: 1, 512>}]} {
    %c0_i32 = arith.constant 0 : i32
    %0 = arith.cmpi eq, %arg0, %c0_i32 : i32
    %1 = arith.extui %0 : i1 to i32
    %c0_i32_0 = arith.constant 0 : i32
    %2 = arith.cmpi ne, %1, %c0_i32_0 : i32
    scf.if %2 {
      %cst_19 = arith.constant 0.000000e+00 : f32
      %30 = vector.broadcast %cst_19 : f32 to vector<1x512xf32>
      %c0_20 = arith.constant 0 : index
      %c0_21 = arith.constant 0 : index
      %31 = vector.load %arg5[%c0_20, %c0_21] : memref<1x512xf32, #tpu.memory_space<vmem>>, vector<1x512xf32>
      tpu.vector_store %arg5[%c0_20, %c0_21], %30 {strides = array<i32>} : memref<1x512xf32, #tpu.memory_space<vmem>>, vector<1x512xf32>,
      %cst_22 = arith.constant 0.000000e+00 : f32
      %32 = vector.broadcast %cst_22 : f32 to vector<1x512xf32>
      %c0_23 = arith.constant 0 : index
      %c0_24 = arith.constant 0 : index
      %33 = vector.load %arg6[%c0_23, %c0_24] : memref<1x512xf32, #tpu.memory_space<vmem>>, vector<1x512xf32>
      tpu.vector_store %arg6[%c0_23, %c0_24], %32 {strides = array<i32>} : memref<1x512xf32, #tpu.memory_space<vmem>>, vector<1x512xf32>,
    } else {
    }
    %c0 = arith.constant 0 : index
    %c0_1 = arith.constant 0 : index
    %3 = vector.load %arg1[%c0, %c0_1] : memref<16x32xbf16, #tpu.memory_space<vmem>>, vector<16x32xbf16>
    %c0_2 = arith.constant 0 : index
    %c0_3 = arith.constant 0 : index
    %4 = vector.load %arg2[%c0_2, %c0_3] : memref<32x512xbf16, #tpu.memory_space<vmem>>, vector<32x512xbf16>
    %cst = arith.constant dense<0.000000e+00> : vector<16x512xf32>
    %5 = tpu.matmul %3, %4, %cst {dimension_numbers = #tpu.dot_dimension_numbers<[1], [0], [0], [1], [0, 0, 1, 1], [], []>} : vector<16x32xbf16>, vector<32x512xbf16>, vector<16x512xf32> -> vector<16x512xf32>
    %c0_4 = arith.constant 0 : index
    %c0_5 = arith.constant 0 : index
    %6 = vector.load %arg3[%c0_4, %c0_5] : memref<1x512xf32, #tpu.memory_space<vmem>>, vector<1x512xf32>
    %7 = vector.broadcast %6 : vector<1x512xf32> to vector<16x512xf32>
    %8 = arith.addf %5, %7 : vector<16x512xf32>
    %9 = arith.truncf %8 : vector<16x512xf32> to vector<16x512xbf16>
    %c0_6 = arith.constant 0 : index
    %c0_7 = arith.constant 0 : index
    %10 = vector.load %arg4[%c0_6, %c0_7] : memref<16x512xbf16, #tpu.memory_space<vmem>>, vector<16x512xbf16>
    tpu.vector_store %arg4[%c0_6, %c0_7], %9 {strides = array<i32>} : memref<16x512xbf16, #tpu.memory_space<vmem>>, vector<16x512xbf16>,
    %11 = tpu.iota {dimensions = array<i32: 0>} : vector<16x512xi32>
    %c16_i32 = arith.constant 16 : i32
    %12 = arith.muli %arg0, %c16_i32 : i32
    %13 = vector.broadcast %12 : i32 to vector<16x512xi32>
    %14 = arith.addi %11, %13 : vector<16x512xi32>
    %c8_i32 = arith.constant 8 : i32
    %15 = vector.broadcast %c8_i32 : i32 to vector<16x512xi32>
    %16 = arith.cmpi slt, %14, %15 : vector<16x512xi32>
    %cst_8 = arith.constant 0.000000e+00 : f32
    %17 = vector.broadcast %cst_8 : f32 to vector<16x512xf32>
    %18 = arith.select %16, %8, %17 : vector<16x512xi1>, vector<16x512xf32>
    %c0_9 = arith.constant 0 : index
    %c0_10 = arith.constant 0 : index
    %19 = vector.load %arg5[%c0_9, %c0_10] : memref<1x512xf32, #tpu.memory_space<vmem>>, vector<1x512xf32>
    %cst_11 = arith.constant dense<0.000000e+00> : vector<512xf32>
    %20 = vector.multi_reduction <add>, %18, %cst_11 [0] : vector<16x512xf32> to vector<512xf32>
    %21 = vector.shape_cast %20 : vector<512xf32> to vector<1x512xf32>
    %22 = arith.addf %19, %21 : vector<1x512xf32>
    %c0_12 = arith.constant 0 : index
    %c0_13 = arith.constant 0 : index
    %23 = vector.load %arg5[%c0_12, %c0_13] : memref<1x512xf32, #tpu.memory_space<vmem>>, vector<1x512xf32>
    tpu.vector_store %arg5[%c0_12, %c0_13], %22 {strides = array<i32>} : memref<1x512xf32, #tpu.memory_space<vmem>>, vector<1x512xf32>,
    %c0_14 = arith.constant 0 : index
    %c0_15 = arith.constant 0 : index
    %24 = vector.load %arg6[%c0_14, %c0_15] : memref<1x512xf32, #tpu.memory_space<vmem>>, vector<1x512xf32>
    %25 = arith.mulf %18, %18 : vector<16x512xf32>
    %cst_16 = arith.constant dense<0.000000e+00> : vector<512xf32>
    %26 = vector.multi_reduction <add>, %25, %cst_16 [0] : vector<16x512xf32> to vector<512xf32>
    %27 = vector.shape_cast %26 : vector<512xf32> to vector<1x512xf32>
    %28 = arith.addf %24, %27 : vector<1x512xf32>
    %c0_17 = arith.constant 0 : index
    %c0_18 = arith.constant 0 : index
    %29 = vector.load %arg6[%c0_17, %c0_18] : memref<1x512xf32, #tpu.memory_space<vmem>>, vector<1x512xf32>
    tpu.vector_store %arg6[%c0_17, %c0_18], %28 {strides = array<i32>} : memref<1x512xf32, #tpu.memory_space<vmem>>, vector<1x512xf32>,
    return
  }
  func.func @transform_0(%arg0: i32) -> (i32, i32) {
    %c0_i32 = arith.constant 0 : i32
    %c0_i32_0 = arith.constant 0 : i32
    return %arg0, %c0_i32 : i32, i32
  }
  func.func @transform_1(%arg0: i32) -> (i32, i32) {
    %c0_i32 = arith.constant 0 : i32
    %c0_i32_0 = arith.constant 0 : i32
    %c0_i32_1 = arith.constant 0 : i32
    return %c0_i32, %c0_i32_0 : i32, i32
  }
  func.func @transform_2(%arg0: i32) -> (i32, i32) {
    %c0_i32 = arith.constant 0 : i32
    %c0_i32_0 = arith.constant 0 : i32
    %c0_i32_1 = arith.constant 0 : i32
    return %c0_i32, %c0_i32_0 : i32, i32
  }
  func.func @transform_3(%arg0: i32) -> (i32, i32) {
    %c0_i32 = arith.constant 0 : i32
    %c0_i32_0 = arith.constant 0 : i32
    return %arg0, %c0_i32 : i32, i32
  }
  func.func @transform_4(%arg0: i32) -> (i32, i32) {
    %c0_i32 = arith.constant 0 : i32
    %c0_i32_0 = arith.constant 0 : i32
    %c0_i32_1 = arith.constant 0 : i32
    return %c0_i32, %c0_i32_0 : i32, i32
  }
  func.func @transform_5(%arg0: i32) -> (i32, i32) {
    %c0_i32 = arith.constant 0 : i32
    %c0_i32_0 = arith.constant 0 : i32
    %c0_i32_1 = arith.constant 0 : i32
    return %c0_i32, %c0_i32_0 : i32, i32
  }
}

</mosaic_0001>

<llo_original>
// kernel: tpu_custom_call.1
$region0: #{tpu_custom_call.1}
  #allocation0 [shape = 'u32[]', space=smem, size = 0x4, offset = 0x4, fixed_abs, tag = 'smem constant byte address 0x4 - core index']
  #allocation1 [shape = 'u32[144,128]{1,0:T(1,128)}', space=vmem, size = 0x12000, scoped, tag = 'internal scratch']
  %s0 = inlined_call_operand.hbm [shape: bf16[16,32], index: 0, kind: input, shape index: {}]
  %s1 = inlined_call_operand.hbm [shape: bf16[32,512], index: 1, kind: input, shape index: {}]
  %s2 = inlined_call_operand.hbm [shape: f32[1,512], index: 2, kind: input, shape index: {}]
  %s3 = inlined_call_operand.hbm [shape: bf16[16,512], index: 3, kind: output, shape index: {0}]
  %s4 = inlined_call_operand.hbm [shape: f32[1,512], index: 4, kind: output, shape index: {1}]
  %s5 = inlined_call_operand.hbm [shape: f32[1,512], index: 5, kind: output, shape index: {2}]
  %6 = xla_tuple %s3, %s4, %s5
  %s7 = sld [smem:[#allocation0]]
  $region54: #{tpu_custom_call.1} parent=0
    _
  %s9 = ssub.s32 1, %s7
  %s10 = scalar_select 0, %s9, %s7
  $region1: #{tpu_custom_call.1} parent=0
    #allocation2 [shape = 'u8[4096]{0}', space=vmem, size = 0x1000, scoped, tag = 'input window, operand 0, single buffered']
    #allocation3 [shape = 's32[1]{0}', space=sflag, size = 0x4, scoped, tag = 'scoped memory for tpu_custom_call.1']
    #allocation4 [shape = 's32[1]{0}', space=sflag, size = 0x4, scoped, tag = 'scoped memory for tpu_custom_call.1']
    #allocation5 [shape = 'u8[32768]{0}', space=vmem, size = 0x8000, scoped, tag = 'input window, operand 1, single buffered']
    #allocation6 [shape = 's32[1]{0}', space=sflag, size = 0x4, scoped, tag = 'scoped memory for tpu_custom_call.1']
    #allocation7 [shape = 'u8[2048]{0}', space=vmem, size = 0x800, scoped, tag = 'input window, operand 2, single buffered']
    #allocation8 [shape = 'u8[16384]{0}', space=vmem, size = 0x4000, scoped, tag = 'output window, operand 0, single buffered']
    #allocation9 [shape = 'u8[2048]{0}', space=vmem, size = 0x800, scoped, tag = 'output window, operand 1, single buffered']
    #allocation10 [shape = 's32[1]{0}', space=sflag, size = 0x4, scoped, tag = 'scoped memory for tpu_custom_call.1']
    #allocation11 [shape = 'u8[2048]{0}', space=vmem, size = 0x800, scoped, tag = 'output window, operand 2, single buffered']
    %11 = vsyncpa [#allocation3], 0
    %12 = vsyncpa [#allocation6], 0
    %13 = vsyncpa [#allocation4], 0
    %14 = vsyncpa [#allocation10], 0
    // Predicated region
    $region2: #{tpu_custom_call.1} parent=1 // pred_check
      _
    $region3: #{tpu_custom_call.1} parent=1 // pred_check_branch
      %16 = sbr.rel (0) target = $region5
    $region4: #{tpu_custom_call.1} parent=1 // pred_region
      %s18 = ssub.s32 128, 128
      %19 = vsyncadd [#allocation3], %s18
      %s20 = sshll.u32 [#allocation2], 4
      %s21 = int_to_ptr.vmem [resolvable:$true] %s20
      %26 = dma.hbm_to_vmem [thread:$0]  %s0, 128, %s21, [#allocation3], 64, 64, 4
    $region5: #{tpu_custom_call.1} parent=1 // pred_fallthru
      _
    // Predicated region
    $region6: #{tpu_custom_call.1} parent=1 // pred_check
      _
    $region7: #{tpu_custom_call.1} parent=1 // pred_check_branch
      %28 = sbr.rel (0) target = $region9
    $region8: #{tpu_custom_call.1} parent=1 // pred_region
      %s30 = ssub.s32 1024, 1024
      %31 = vsyncadd [#allocation6], %s30
      %s32 = sshll.u32 [#allocation5], 4
      %s33 = int_to_ptr.vmem [resolvable:$true] %s32
      %38 = dma.hbm_to_vmem [thread:$0]  %s1, 1024, %s33, [#allocation6], 256, 256, 16
    $region9: #{tpu_custom_call.1} parent=1 // pred_fallthru
      _
    // Predicated region
    $region10: #{tpu_custom_call.1} parent=1 // pred_check
      _
    $region11: #{tpu_custom_call.1} parent=1 // pred_check_branch
      %40 = sbr.rel (0) target = $region13
    $region12: #{tpu_custom_call.1} parent=1 // pred_region
      %s42 = ssub.s32 64, 64
      %43 = vsyncadd [#allocation6], %s42
      %s45 = sshll.u32 [#allocation7], 4
      %s46 = int_to_ptr.vmem [resolvable:$true] %s45
      %48 = dma.hbm_to_vmem [thread:$0]  %s2, 64, %s46, [#allocation6]
    $region13: #{tpu_custom_call.1} parent=1 // pred_fallthru
      _
    // Predicated region
    $region14: #{tpu_custom_call.1} parent=1 // pred_check
      _
    $region15: #{tpu_custom_call.1} parent=1 // pred_check_branch
      %50 = sbr.rel (0) target = $region17
    $region16: #{tpu_custom_call.1} parent=1 // pred_region
      %51 = dma.done [#allocation3], 128
    $region17: #{tpu_custom_call.1} parent=1 // pred_fallthru
      _
    // Predicated region
    $region18: #{tpu_custom_call.1} parent=1 // pred_check
      _
    $region19: #{tpu_custom_call.1} parent=1 // pred_check_branch
      %53 = sbr.rel (0) target = $region21
    $region20: #{tpu_custom_call.1} parent=1 // pred_region
      %54 = dma.done [#allocation6], 1024
    $region21: #{tpu_custom_call.1} parent=1 // pred_fallthru
      _
    // Predicated region
    $region22: #{tpu_custom_call.1} parent=1 // pred_check
      _
    $region23: #{tpu_custom_call.1} parent=1 // pred_check_branch
      %56 = sbr.rel (0) target = $region25
    $region24: #{tpu_custom_call.1} parent=1 // pred_region
      %57 = dma.done [#allocation6], 64
    $region25: #{tpu_custom_call.1} parent=1 // pred_fallthru
      _
    %p59 = scmp.eq.s32.totalorder 0, 0
    // Predicated region
    $region26: #{tpu_custom_call.1} parent=1 // pred_check
      %p60 = pneg %p59
    $region27: #{tpu_custom_call.1} parent=1 // pred_check_branch
      %62 = sbr.rel (%p60) target = $region29
    $region28: #{tpu_custom_call.1} parent=1 // pred_region
      %v63 = vlaneseq
      %vm64 = vcmp.ge.s32.totalorder %v63, 0
      %vm65 = vcmp.lt.s32.totalorder %v63, 512
      %vm66 = vmand %vm64, %vm65
      %67 = vst.msk [vmem:[#allocation9] sm:$0xf] %vm66, 0.0
      %68 = vst.msk [vmem:[#allocation11] sm:$0xf] %vm66, 0.0
    $region29: #{tpu_custom_call.1} parent=1 // pred_fallthru
      _
    %v69 = vld [vmem:[#allocation2] sm:$0xf]
    %v70 = vld [vmem:[#allocation2 + $0x4] sm:$0xf]
    %v71 = vld [vmem:[#allocation5] sm:$0xff]
    %v72 = vld [vmem:[#allocation5 + $0x8] sm:$0xff]
    %v73 = vld [vmem:[#allocation5 + $0x10] sm:$0xff]
    %v74 = vld [vmem:[#allocation5 + $0x18] sm:$0xff]
    %v75 = vld [vmem:[#allocation5 + $0x20] sm:$0xff]
    %v76 = vld [vmem:[#allocation5 + $0x28] sm:$0xff]
    %v77 = vld [vmem:[#allocation5 + $0x30] sm:$0xff]
    %v78 = vld [vmem:[#allocation5 + $0x38] sm:$0xff]
    %v79 = vld [vmem:[#allocation7] sm:$0xf]
    %v81 = vlaneseq
    %v82 = vshrl.u32 %v81, 7
    %v83 = vsub.s32 0, %v82
    %v84 = vrot.slane %v79, %v83
    %v85 = vlaneseq
    %v86 = vshrl.u32 %v85, 7
    %v87 = vsub.s32 1, %v86
    %v88 = vrot.slane %v79, %v87
    %v89 = vlaneseq
    %v90 = vshrl.u32 %v89, 7
    %v91 = vsub.s32 2, %v90
    %v92 = vrot.slane %v79, %v91
    %v93 = vlaneseq
    %v94 = vshrl.u32 %v93, 7
    %v95 = vsub.s32 3, %v94
    %v96 = vrot.slane %v79, %v95
    %v103 = vunpack.c.l.b16 %v69
    %v104 = vunpack.c.l.b16 %v70
    %v105 = vpack.c.b16 %v104, %v103
    %v114 = vunpack.c.l.b16 %v71
    %v115 = vunpack.c.h.b16 %v71
    %v116 = vunpack.c.l.b16 %v72
    %v117 = vunpack.c.h.b16 %v72
    %v118 = vunpack.c.l.b16 %v73
    %v119 = vunpack.c.h.b16 %v73
    %v120 = vunpack.c.l.b16 %v74
    %v121 = vunpack.c.h.b16 %v74
    %v122 = vunpack.c.l.b16 %v75
    %v123 = vunpack.c.h.b16 %v75
    %v124 = vunpack.c.l.b16 %v76
    %v125 = vunpack.c.h.b16 %v76
    %v126 = vunpack.c.l.b16 %v77
    %v127 = vunpack.c.h.b16 %v77
    %v128 = vunpack.c.l.b16 %v78
    %v129 = vunpack.c.h.b16 %v78
    %v130 = vpack.c.b16 %v118, %v114
    %v131 = vpack.c.b16 %v119, %v115
    %v132 = vpack.c.b16 %v120, %v116
    %v133 = vpack.c.b16 %v121, %v117
    %v134 = vpack.c.b16 %v126, %v122
    %v135 = vpack.c.b16 %v127, %v123
    %v136 = vpack.c.b16 %v128, %v124
    %v137 = vpack.c.b16 %v129, %v125
    %vm146 = vcmask 261120
    %v148 = vsel %vm146, %v105, 0
    %150 = vmatprep.subr.bf16.mxu0 0
    %151 = vmatpush1.bf16.msra.mxu0 0
    %152 = vmatprep.subr.bf16.mxu0 0
    %153 = vmatpush1.bf16.msra.mxu0 0
    %154 = vmatprep.subr.bf16.mxu0 0
    %155 = vmatpush1.bf16.msra.mxu0 0
    %156 = vmatprep.subr.bf16.mxu0 0
    %157 = vmatpush1.bf16.msra.mxu0 0
    %158 = vmatprep.subr.bf16.mxu0 0
    %159 = vmatpush1.bf16.msra.mxu0 0
    %160 = vmatprep.subr.bf16.mxu0 0
    %161 = vmatpush1.bf16.msra.mxu0 0
    %162 = vmatprep.subr.bf16.mxu0 %v135
    %163 = vmatpush1.bf16.msra.mxu0 %v134
    %164 = vmatprep.subr.bf16.mxu0 %v131
    %165 = vmatpush1.bf16.msra.mxu0 %v130
    %166 = vmatprep.subr.bf16.mxu0 0
    %167 = vmatpush2.bf16.msra.mxu0 0
    %168 = vmatprep.subr.bf16.mxu0 0
    %169 = vmatpush2.bf16.msra.mxu0 0
    %170 = vmatprep.subr.bf16.mxu0 0
    %171 = vmatpush2.bf16.msra.mxu0 0
    %172 = vmatprep.subr.bf16.mxu0 0
    %173 = vmatpush2.bf16.msra.mxu0 0
    %174 = vmatprep.subr.bf16.mxu0 0
    %175 = vmatpush2.bf16.msra.mxu0 0
    %176 = vmatprep.subr.bf16.mxu0 0
    %177 = vmatpush2.bf16.msra.mxu0 0
    %178 = vmatprep.subr.bf16.mxu0 0
    %179 = vmatpush2.bf16.msra.mxu0 0
    %180 = vmatprep.subr.bf16.mxu0 0
    %181 = vmatpush2.bf16.msra.mxu0 0
    %182 = vmatprep.mubr.bf16.mxu0 0
    %183 = vmatmul.mubr.bf16.gmra.mxu0 %v148
    %v184 = vpop.f32.mrf.mxu0
    %v185 = vadd.f32 %v84, %v184
    %v186 = vpop.f32.mrf.mxu0
    %v187 = vadd.f32 %v88, %v186
    %v188 = vpop.f32.mrf.mxu0
    %v189 = vadd.f32 %v84, %v188
    %v190 = vpop.f32.mrf.mxu0
    %v191 = vadd.f32 %v88, %v190
    %192 = vdwg.mxu0
    %193 = vmatprep.subr.bf16.mxu0 0
    %194 = vmatpush1.bf16.msra.mxu0 0
    %195 = vmatprep.subr.bf16.mxu0 0
    %196 = vmatpush1.bf16.msra.mxu0 0
    %197 = vmatprep.subr.bf16.mxu0 0
    %198 = vmatpush1.bf16.msra.mxu0 0
    %199 = vmatprep.subr.bf16.mxu0 0
    %200 = vmatpush1.bf16.msra.mxu0 0
    %201 = vmatprep.subr.bf16.mxu0 0
    %202 = vmatpush1.bf16.msra.mxu0 0
    %203 = vmatprep.subr.bf16.mxu0 0
    %204 = vmatpush1.bf16.msra.mxu0 0
    %205 = vmatprep.subr.bf16.mxu0 %v137
    %206 = vmatpush1.bf16.msra.mxu0 %v136
    %207 = vmatprep.subr.bf16.mxu0 %v133
    %208 = vmatpush1.bf16.msra.mxu0 %v132
    %209 = vmatprep.subr.bf16.mxu0 0
    %210 = vmatpush2.bf16.msra.mxu0 0
    %211 = vmatprep.subr.bf16.mxu0 0
    %212 = vmatpush2.bf16.msra.mxu0 0
    %213 = vmatprep.subr.bf16.mxu0 0
    %214 = vmatpush2.bf16.msra.mxu0 0
    %215 = vmatprep.subr.bf16.mxu0 0
    %216 = vmatpush2.bf16.msra.mxu0 0
    %217 = vmatprep.subr.bf16.mxu0 0
    %218 = vmatpush2.bf16.msra.mxu0 0
    %219 = vmatprep.subr.bf16.mxu0 0
    %220 = vmatpush2.bf16.msra.mxu0 0
    %221 = vmatprep.subr.bf16.mxu0 0
    %222 = vmatpush2.bf16.msra.mxu0 0
    %223 = vmatprep.subr.bf16.mxu0 0
    %224 = vmatpush2.bf16.msra.mxu0 0
    %225 = vmatprep.mubr.bf16.mxu0 0
    %226 = vmatmul.mubr.bf16.gmra.mxu0 %v148
    %v227 = vpop.f32.mrf.mxu0
    %v228 = vadd.f32 %v92, %v227
    %v229 = vpop.f32.mrf.mxu0
    %v230 = vadd.f32 %v96, %v229
    %v231 = vpop.f32.mrf.mxu0
    %v232 = vadd.f32 %v92, %v231
    %v233 = vpop.f32.mrf.mxu0
    %v234 = vadd.f32 %v96, %v233
    %235 = vdwg.mxu0
    %v236 = vpack.c.bf16 %v189, %v185
    %v237 = vpack.c.bf16 %v191, %v187
    %v238 = vpack.c.bf16 %v232, %v228
    %v239 = vpack.c.bf16 %v234, %v230
    %v244 = vunpack.c.l.b16 %v236
    %v245 = vunpack.c.l.b16 %v237
    %v246 = vunpack.c.l.b16 %v238
    %v247 = vunpack.c.l.b16 %v239
    %v248 = vunpack.c.h.b16 %v236
    %v249 = vunpack.c.h.b16 %v237
    %v250 = vunpack.c.h.b16 %v238
    %v251 = vunpack.c.h.b16 %v239
    %v252 = vpack.c.b16 %v245, %v244
    %v253 = vpack.c.b16 %v247, %v246
    %v254 = vpack.c.b16 %v249, %v248
    %v255 = vpack.c.b16 %v251, %v250
    %260 = vst [vmem:[#allocation8] sm:$0xff] %v252
    %261 = vst [vmem:[#allocation8 + $0x8] sm:$0xff] %v253
    %262 = vst [vmem:[#allocation8 + $0x10] sm:$0xff] %v254
    %263 = vst [vmem:[#allocation8 + $0x18] sm:$0xff] %v255
    %v264 = vlaneseq
    %v265 = vshrl.u32 %v264, 7
    %v266 = vadd.s32 %v265, 8
    %s267 = smul.u32 0, 16
    %v268 = vstv %s267
    %v269 = vadd.s32 %v265, %v268
    %v270 = vadd.s32 %v266, %v268
    %vm271 = vcmp.lt.s32.totalorder %v269, 8
    %vm272 = vcmp.lt.s32.totalorder %v270, 8
    %v273 = vsel %vm271, %v185, 0.0
    %v274 = vsel %vm271, %v187, 0.0
    %v275 = vsel %vm271, %v228, 0.0
    %v276 = vsel %vm271, %v230, 0.0
    %v277 = vsel %vm272, %v189, 0.0
    %v278 = vsel %vm272, %v191, 0.0
    %v279 = vsel %vm272, %v232, 0.0
    %v280 = vsel %vm272, %v234, 0.0
    %v281 = vld [vmem:[#allocation9] sm:$0xf]
    %v282 = vadd.f32 %v273, %v277
    %v283 = vrot.slane %v282, 4
    %v284 = vadd.f32 %v282, %v283
    %v285 = vrot.slane %v284, 2
    %v286 = vadd.f32 %v284, %v285
    %v287 = vrot.slane %v286, 1
    %v288 = vadd.f32 %v286, %v287
    %v289 = vadd.f32 %v274, %v278
    %v290 = vrot.slane %v289, 4
    %v291 = vadd.f32 %v289, %v290
    %v292 = vrot.slane %v291, 2
    %v293 = vadd.f32 %v291, %v292
    %v294 = vrot.slane %v293, 1
    %v295 = vadd.f32 %v293, %v294
    %v296 = vadd.f32 %v275, %v279
    %v297 = vrot.slane %v296, 4
    %v298 = vadd.f32 %v296, %v297
    %v299 = vrot.slane %v298, 2
    %v300 = vadd.f32 %v298, %v299
    %v301 = vrot.slane %v300, 1
    %v302 = vadd.f32 %v300, %v301
    %v303 = vadd.f32 %v276, %v280
    %v304 = vrot.slane %v303, 4
    %v305 = vadd.f32 %v303, %v304
    %v306 = vrot.slane %v305, 2
    %v307 = vadd.f32 %v305, %v306
    %v308 = vrot.slane %v307, 1
    %v309 = vadd.f32 %v307, %v308
    %v314 = vcombine.low %v288, %v295
    %v315 = vcombine.low %v302, %v309
    %v317 = vunpack.c.l.s4 1966171168
    %v318 = vunpack.c.0.s8 %v317
    %v319 = vlaneseq
    %v320 = vshrl.u32 %v319, 7
    %v321 = vsub.s32 %v318, %v320
    %v322 = vrot.slane %v314, %v321
    %v324 = vunpack.c.l.s4 1966171168
    %v325 = vunpack.c.0.s8 %v324
    %v326 = vlaneseq
    %v327 = vshrl.u32 %v326, 7
    %v328 = vsub.s32 %v325, %v327
    %v329 = vrot.slane %v315, %v328
    %v330 = vcombine.low %v322, %v329
    %v332 = vunpack.c.l.s4 1966171168
    %v333 = vunpack.c.0.s8 %v332
    %v334 = vlaneseq
    %v335 = vshrl.u32 %v334, 7
    %v336 = vsub.s32 %v333, %v335
    %v337 = vrot.slane %v330, %v336
    %v339 = vadd.f32 %v281, %v337
    %v340 = vlaneseq
    %vm341 = vcmp.ge.s32.totalorder %v340, 0
    %vm342 = vcmp.lt.s32.totalorder %v340, 512
    %vm343 = vmand %vm341, %vm342
    %344 = vst.msk [vmem:[#allocation9] sm:$0xf] %vm343, %v339
    %v345 = vld [vmem:[#allocation11] sm:$0xf]
    %v346 = vmul.f32 %v273, %v273
    %v347 = vmul.f32 %v274, %v274
    %v348 = vmul.f32 %v275, %v275
    %v349 = vmul.f32 %v276, %v276
    %v350 = vmul.f32 %v277, %v277
    %v351 = vmul.f32 %v278, %v278
    %v352 = vmul.f32 %v279, %v279
    %v353 = vmul.f32 %v280, %v280
    %v354 = vadd.f32 %v346, %v350
    %v355 = vrot.slane %v354, 4
    %v356 = vadd.f32 %v354, %v355
    %v357 = vrot.slane %v356, 2
    %v358 = vadd.f32 %v356, %v357
    %v359 = vrot.slane %v358, 1
    %v360 = vadd.f32 %v358, %v359
    %v361 = vadd.f32 %v347, %v351
    %v362 = vrot.slane %v361, 4
    %v363 = vadd.f32 %v361, %v362
    %v364 = vrot.slane %v363, 2
    %v365 = vadd.f32 %v363, %v364
    %v366 = vrot.slane %v365, 1
    %v367 = vadd.f32 %v365, %v366
    %v368 = vadd.f32 %v348, %v352
    %v369 = vrot.slane %v368, 4
    %v370 = vadd.f32 %v368, %v369
    %v371 = vrot.slane %v370, 2
    %v372 = vadd.f32 %v370, %v371
    %v373 = vrot.slane %v372, 1
    %v374 = vadd.f32 %v372, %v373
    %v375 = vadd.f32 %v349, %v353
    %v376 = vrot.slane %v375, 4
    %v377 = vadd.f32 %v375, %v376
    %v378 = vrot.slane %v377, 2
    %v379 = vadd.f32 %v377, %v378
    %v380 = vrot.slane %v379, 1
    %v381 = vadd.f32 %v379, %v380
    %v386 = vcombine.low %v360, %v367
    %v387 = vcombine.low %v374, %v381
    %v389 = vunpack.c.l.s4 1966171168
    %v390 = vunpack.c.0.s8 %v389
    %v391 = vlaneseq
    %v392 = vshrl.u32 %v391, 7
    %v393 = vsub.s32 %v390, %v392
    %v394 = vrot.slane %v386, %v393
    %v396 = vunpack.c.l.s4 1966171168
    %v397 = vunpack.c.0.s8 %v396
    %v398 = vlaneseq
    %v399 = vshrl.u32 %v398, 7
    %v400 = vsub.s32 %v397, %v399
    %v401 = vrot.slane %v387, %v400
    %v402 = vcombine.low %v394, %v401
    %v404 = vunpack.c.l.s4 1966171168
    %v405 = vunpack.c.0.s8 %v404
    %v406 = vlaneseq
    %v407 = vshrl.u32 %v406, 7
    %v408 = vsub.s32 %v405, %v407
    %v409 = vrot.slane %v402, %v408
    %v411 = vadd.f32 %v345, %v409
    %412 = vst.msk [vmem:[#allocation11] sm:$0xf] %vm343, %v411
    // Predicated region
    $region30: #{tpu_custom_call.1} parent=1 // pred_check
      _
    $region31: #{tpu_custom_call.1} parent=1 // pred_check_branch
      %414 = sbr.rel (0) target = $region33
    $region32: #{tpu_custom_call.1} parent=1 // pred_region
      %s416 = ssub.s32 512, 512
      %417 = vsyncadd [#allocation4], %s416
      %s418 = sshll.u32 [#allocation8], 4
      %s419 = int_to_ptr.vmem [resolvable:$true] %s418
      %424 = dma.vmem_to_hbm [thread:$0]  %s419, 512, %s3, [#allocation4], 256, 256, 16
    $region33: #{tpu_custom_call.1} parent=1 // pred_fallthru
      _
    // Predicated region
    $region34: #{tpu_custom_call.1} parent=1 // pred_check
      _
    $region35: #{tpu_custom_call.1} parent=1 // pred_check_branch
      %426 = sbr.rel (0) target = $region37
    $region36: #{tpu_custom_call.1} parent=1 // pred_region
      %s428 = ssub.s32 64, 64
      %429 = vsyncadd [#allocation10], %s428
      %s431 = sshll.u32 [#allocation9], 4
      %s432 = int_to_ptr.vmem [resolvable:$true] %s431
      %434 = dma.vmem_to_hbm [thread:$0]  %s432, 64, %s4, [#allocation10]
    $region37: #{tpu_custom_call.1} parent=1 // pred_fallthru
      _
    // Predicated region
    $region38: #{tpu_custom_call.1} parent=1 // pred_check
      _
    $region39: #{tpu_custom_call.1} parent=1 // pred_check_branch
      %436 = sbr.rel (0) target = $region41
    $region40: #{tpu_custom_call.1} parent=1 // pred_region
      %s438 = ssub.s32 64, 64
      %439 = vsyncadd [#allocation10], %s438
      %s441 = sshll.u32 [#allocation11], 4
      %s442 = int_to_ptr.vmem [resolvable:$true] %s441
      %444 = dma.vmem_to_hbm [thread:$0]  %s442, 64, %s5, [#allocation10]
    $region41: #{tpu_custom_call.1} parent=1 // pred_fallthru
      _
    // Predicated region
    $region42: #{tpu_custom_call.1} parent=1 // pred_check
      _
    $region43: #{tpu_custom_call.1} parent=1 // pred_check_branch
      %446 = sbr.rel (0) target = $region45
    $region44: #{tpu_custom_call.1} parent=1 // pred_region
      %447 = dma.done [#allocation4], 512
    $region45: #{tpu_custom_call.1} parent=1 // pred_fallthru
      _
    // Predicated region
    $region46: #{tpu_custom_call.1} parent=1 // pred_check
      _
    $region47: #{tpu_custom_call.1} parent=1 // pred_check_branch
      %449 = sbr.rel (0) target = $region49
    $region48: #{tpu_custom_call.1} parent=1 // pred_region
      %450 = dma.done [#allocation10], 64
    $region49: #{tpu_custom_call.1} parent=1 // pred_fallthru
      _
    // Predicated region
    $region50: #{tpu_custom_call.1} parent=1 // pred_check
      _
    $region51: #{tpu_custom_call.1} parent=1 // pred_check_branch
      %452 = sbr.rel (0) target = $region53
    $region52: #{tpu_custom_call.1} parent=1 // pred_region
      %453 = dma.done [#allocation10], 64
    $region53: #{tpu_custom_call.1} parent=1 // pred_fallthru
      _
    %454 = vsyncpa [#allocation3], 1
    %455 = vsyncpa [#allocation6], 1
    %456 = vsyncpa [#allocation4], 1
    %457 = vsyncpa [#allocation10], 1

</llo_original>
